<compile_context>
chip_gen: v7x
topology: tpu7x:2x2x1
jax: 0.10.0
libtpu: 0.0.40
codegen_flags: <defaults>
</compile_context>

<pallas_src>
import functools

import jax
import jax.numpy as jnp
from jax.experimental import pallas as pl
from jax.experimental.pallas import tpu as pltpu


def _pskd_temp_kernel(out_ref, tgt_ref, loss_ref, *, inv_T, T_int, sqrt_chain,
                      n_total, tile_n, ragged):
    logits = out_ref[...].astype(jnp.float32)      # (tile_n, C)
    targets = tgt_ref[...].astype(jnp.float32)     # (tile_n, C)

    # ---- steps 1-2: lse1 (log_softmax of logits) and lse2 (logsumexp(log_sm/T))
    m1 = jnp.max(logits, axis=1, keepdims=True)
    if T_int is not None:
        # Single shared exponential: p = exp((logits - m1) / T) in (0, 1].
        p = jnp.exp((logits - m1) * inv_T)
        # p**T via repeated VPU multiplies (T is a small positive integer).
        pT = p
        k = 1
        while k < T_int:
            if 2 * k <= T_int:
                pT = pT * pT
                k *= 2
            else:
                pT = pT * p
                k += 1
        sum1 = jnp.sum(pT, axis=1, keepdims=True)            # in [1, C]
        log_sum1 = jnp.log(sum1)
        lse1 = m1 + log_sum1                                  # logsumexp(logits)
        log_sm = logits - lse1                                # log_softmax, <= 0
        # logsumexp(log_sm / T) = log(sum(p)) - log(sum1) / T   (exact algebra)
        lse2 = jnp.log(jnp.sum(p, axis=1, keepdims=True)) - log_sum1 * inv_T
    else:
        # General-T fallback (two block-wide exps, still overflow-safe).
        lse1 = jnp.log(jnp.sum(jnp.exp(logits - m1), axis=1, keepdims=True)) + m1
        log_sm = logits - lse1
        x = log_sm * inv_T                                    # <= 0, no overflow
        lse2 = jnp.log(jnp.sum(jnp.exp(x), axis=1, keepdims=True))

    # ---- step 3: unnormalized softmax(log(targets)/T) == targets**(1/T) in [0,1]
    if sqrt_chain is not None:
        e3 = targets
        for _ in range(sqrt_chain):                           # T in {1,2,4,8}
            e3 = jnp.sqrt(e3)
    else:
        # exp(log(0) * inv_T) = 0, matching torch softmax of -inf rows/entries.
        e3 = jnp.exp(jnp.log(targets) * inv_T)
    s3 = jnp.sum(e3, axis=1, keepdims=True)                   # (tile_n, 1)

    # ---- step 4 (fused): per row,
    #   sum(-t_soft * log_probs) = lse2 - (1/T) * sum(t_soft * log_sm)
    # since t_soft sums to 1.  T**2/N scaling is applied in the wrapper.
    w = jnp.sum(e3 * log_sm, axis=1, keepdims=True)           # (tile_n, 1)
    row_loss = lse2 - inv_T * (w / s3)                        # (tile_n, 1)

    if ragged:
        # Only emitted when N % tile_n != 0: zero phantom rows of the last tile.
        i = pl.program_id(0)
        row_ids = i * tile_n + jax.lax.broadcasted_iota(jnp.int32, row_loss.shape, 0)
        row_loss = jnp.where(row_ids < n_total, row_loss, 0.0)

    loss_ref[...] = row_loss


def pskd_temperature_loss(output: jax.Array, targets: jax.Array, T: float,
                          *, tile_n: int | None = None) -> jax.Array:
    """output, targets: (N, C) float (f32 or bf16).  Returns scalar f32 loss."""
    assert output.ndim == 2 and output.shape == targets.shape
    N, C = output.shape
    T = float(T)
    inv_T = 1.0 / T

    # Trace-time specialisation of the transcendental paths.
    T_int = int(T) if (T == int(T) and 1.0 <= T <= 8.0) else None
    sqrt_chain = {1.0: 0, 2.0: 1, 4.0: 2, 8.0: 3}.get(T, None)

    # Generation-aware block sizing (v5e/v6e: 128 MiB VMEM; v7x: 64 MiB).
    vmem_phys = 64 * 1024 * 1024
    try:
        info = pltpu.get_tpu_info()
        vmem_phys = int(getattr(info, "vmem_capacity_bytes", vmem_phys))
    except Exception:
        pass
    if vmem_phys >= 100 * 1024 * 1024:
        target_block_bytes = 6 * 1024 * 1024      # 128 MiB parts: go bigger
    else:
        target_block_bytes = 3 * 1024 * 1024      # v7x: temporary-aware budget

    if tile_n is None:
        elem_bytes = max(2, jnp.dtype(output.dtype).itemsize)
        tile_n = max(8, target_block_bytes // (C * elem_bytes))
    if N <= tile_n:
        tile_n = N                                # full-dim block: always legal
    else:
        tile_n = max(8, (tile_n // 8) * 8)        # keep sublane (8) alignment

    grid_n = pl.cdiv(N, tile_n)
    ragged = (N % tile_n) != 0

    # VMEM budget: 2 inputs x 2 pipeline buffers + ~4 live block temporaries.
    block_bytes = tile_n * C * 4
    vmem_limit = 8 * block_bytes + 2 * 1024 * 1024
    vmem_limit = int(min(max(vmem_limit, 16 * 1024 * 1024),
                         min(vmem_phys * 3 // 4, 98 * 1024 * 1024)))

    kernel = functools.partial(
        _pskd_temp_kernel,
        inv_T=inv_T,
        T_int=T_int,
        sqrt_chain=sqrt_chain,
        n_total=N,
        tile_n=tile_n,
        ragged=ragged,
    )

    partials = pl.pallas_call(
        kernel,
        out_shape=jax.ShapeDtypeStruct((N, 1), jnp.float32),
        grid=(grid_n,),
        in_specs=[
            pl.BlockSpec((tile_n, C), lambda i: (i, 0)),
            pl.BlockSpec((tile_n, C), lambda i: (i, 0)),
        ],
        out_specs=pl.BlockSpec((tile_n, 1), lambda i: (i, 0)),
        compiler_params=pltpu.CompilerParams(
            dimension_semantics=("parallel",),    # per-tile partials, no carry
            vmem_limit_bytes=vmem_limit,
        ),
    )(output, targets)

    return jnp.sum(partials) * jnp.float32((T * T) / float(N))


def _reference_loss(output, targets, T):
    # Pure-JAX reference of the PyTorch forward (returned value only).
    log_sm = jax.nn.log_softmax(output, axis=1)
    log_probs = jax.nn.log_softmax(log_sm / T, axis=1)
    t_soft = jax.nn.softmax(jnp.log(targets) / T, axis=1)
    return jnp.sum(jnp.mean(-t_soft * log_probs, axis=0)) * (T ** 2)


if __name__ == "__main__":
    key = jax.random.PRNGKey(0)
    keys = jax.random.split(key, 8)

    def make_inputs(k1, k2, n, c):
        out = jax.random.normal(k1, (n, c), dtype=jnp.float32)
        tgt = jax.nn.softmax(jax.random.normal(k2, (n, c), dtype=jnp.float32), axis=1)
        return out, tgt

    # Case 1: T=4, multi-tile parallel grid (integer-T shared-exp path).
    o1, t1 = make_inputs(keys[0], keys[1], 16, 256)
    l1 = jax.block_until_ready(pskd_temperature_loss(o1, t1, 4.0, tile_n=8))
    r1 = _reference_loss(o1, t1, 4.0)
    assert jnp.allclose(l1, r1, rtol=5e-5, atol=1e-5), (l1, r1)

    # Case 2: T=4, ragged last tile (N not a multiple of tile_n).
    o2, t2 = make_inputs(keys[2], keys[3], 20, 384)
    l2 = jax.block_until_ready(pskd_temperature_loss(o2, t2, 4.0, tile_n=8))
    r2 = _reference_loss(o2, t2, 4.0)
    assert jnp.allclose(l2, r2, rtol=5e-5, atol=1e-5), (l2, r2)

    # Case 3: T=2, default (single) tile — sqrt specialisation for targets**(1/T).
    o3, t3 = make_inputs(keys[4], keys[5], 16, 512)
    l3 = jax.block_until_ready(pskd_temperature_loss(o3, t3, 2.0))
    r3 = _reference_loss(o3, t3, 2.0)
    assert jnp.allclose(l3, r3, rtol=5e-5, atol=1e-5), (l3, r3)

    # Case 4: non-integer T — general fallback path.
    o4, t4 = make_inputs(keys[6], keys[7], 12, 256)
    l4 = jax.block_until_ready(pskd_temperature_loss(o4, t4, 3.5))
    r4 = _reference_loss(o4, t4, 3.5)
    assert jnp.allclose(l4, r4, rtol=5e-5, atol=1e-5), (l4, r4)

    print("KERNEL_OK")
</pallas_src>

<mosaic_0001>
module attributes {stable_mosaic.version = 11 : i64} {
  func.func @_pskd_temp_kernel(%arg0: i32, %arg1: memref<8x256xf32, #tpu.memory_space<vmem>>, %arg2: memref<8x256xf32, #tpu.memory_space<vmem>>, %arg3: memref<8x1xf32, #tpu.memory_space<vmem>>) attributes {dimension_semantics = [#tpu.dimension_semantics<parallel>], iteration_bounds = array<i64: 2>, scalar_prefetch = 0 : i64, scratch_operands = 0 : i64, tpu.core_type = #tpu.core_type<tc>, window_params = [{transform_indices = @transform_0, window_bounds = array<i64: 8, 256>}, {transform_indices = @transform_1, window_bounds = array<i64: 8, 256>}, {transform_indices = @transform_2, window_bounds = array<i64: 8, 1>}]} {
    %c0 = arith.constant 0 : index
    %c0_0 = arith.constant 0 : index
    %0 = vector.load %arg1[%c0, %c0_0] : memref<8x256xf32, #tpu.memory_space<vmem>>, vector<8x256xf32>
    %c0_1 = arith.constant 0 : index
    %c0_2 = arith.constant 0 : index
    %1 = vector.load %arg2[%c0_1, %c0_2] : memref<8x256xf32, #tpu.memory_space<vmem>>, vector<8x256xf32>
    %cst = arith.constant dense<0xFF800000> : vector<8xf32>
    %2 = vector.multi_reduction <maximumf>, %0, %cst [1] : vector<8x256xf32> to vector<8xf32>
    %3 = vector.shape_cast %2 : vector<8xf32> to vector<8x1xf32>
    %4 = vector.broadcast %3 : vector<8x1xf32> to vector<8x256xf32>
    %5 = arith.subf %0, %4 : vector<8x256xf32>
    %cst_3 = arith.constant 2.500000e-01 : f32
    %6 = vector.broadcast %cst_3 : f32 to vector<8x256xf32>
    %7 = arith.mulf %5, %6 : vector<8x256xf32>
    %8 = math.exp %7 : vector<8x256xf32>
    %9 = arith.mulf %8, %8 : vector<8x256xf32>
    %10 = arith.mulf %9, %9 : vector<8x256xf32>
    %cst_4 = arith.constant dense<0.000000e+00> : vector<8xf32>
    %11 = vector.multi_reduction <add>, %10, %cst_4 [1] : vector<8x256xf32> to vector<8xf32>
    %12 = vector.shape_cast %11 : vector<8xf32> to vector<8x1xf32>
    %13 = math.log %12 : vector<8x1xf32>
    %14 = arith.addf %3, %13 : vector<8x1xf32>
    %15 = vector.broadcast %14 : vector<8x1xf32> to vector<8x256xf32>
    %16 = arith.subf %0, %15 : vector<8x256xf32>
    %cst_5 = arith.constant dense<0.000000e+00> : vector<8xf32>
    %17 = vector.multi_reduction <add>, %8, %cst_5 [1] : vector<8x256xf32> to vector<8xf32>
    %18 = vector.shape_cast %17 : vector<8xf32> to vector<8x1xf32>
    %19 = math.log %18 : vector<8x1xf32>
    %cst_6 = arith.constant 2.500000e-01 : f32
    %20 = vector.broadcast %cst_6 : f32 to vector<8x1xf32>
    %21 = arith.mulf %13, %20 : vector<8x1xf32>
    %22 = arith.subf %19, %21 : vector<8x1xf32>
    %23 = math.sqrt %1 : vector<8x256xf32>
    %24 = math.sqrt %23 : vector<8x256xf32>
    %cst_7 = arith.constant dense<0.000000e+00> : vector<8xf32>
    %25 = vector.multi_reduction <add>, %24, %cst_7 [1] : vector<8x256xf32> to vector<8xf32>
    %26 = vector.shape_cast %25 : vector<8xf32> to vector<8x1xf32>
    %27 = arith.mulf %24, %16 : vector<8x256xf32>
    %cst_8 = arith.constant dense<0.000000e+00> : vector<8xf32>
    %28 = vector.multi_reduction <add>, %27, %cst_8 [1] : vector<8x256xf32> to vector<8xf32>
    %29 = vector.shape_cast %28 : vector<8xf32> to vector<8x1xf32>
    %30 = arith.divf %29, %26 : vector<8x1xf32>
    %cst_9 = arith.constant 2.500000e-01 : f32
    %31 = vector.broadcast %cst_9 : f32 to vector<8x1xf32>
    %32 = arith.mulf %31, %30 : vector<8x1xf32>
    %33 = arith.subf %22, %32 : vector<8x1xf32>
    %c0_10 = arith.constant 0 : index
    %c0_11 = arith.constant 0 : index
    %34 = vector.load %arg3[%c0_10, %c0_11] : memref<8x1xf32, #tpu.memory_space<vmem>>, vector<8x1xf32>
    tpu.vector_store %arg3[%c0_10, %c0_11], %33 {strides = array<i32>} : memref<8x1xf32, #tpu.memory_space<vmem>>, vector<8x1xf32>,
    return
  }
  func.func @transform_0(%arg0: i32) -> (i32, i32) {
    %c0_i32 = arith.constant 0 : i32
    %c0_i32_0 = arith.constant 0 : i32
    return %arg0, %c0_i32 : i32, i32
  }
  func.func @transform_1(%arg0: i32) -> (i32, i32) {
    %c0_i32 = arith.constant 0 : i32
    %c0_i32_0 = arith.constant 0 : i32
    return %arg0, %c0_i32 : i32, i32
  }
  func.func @transform_2(%arg0: i32) -> (i32, i32) {
    %c0_i32 = arith.constant 0 : i32
    %c0_i32_0 = arith.constant 0 : i32
    return %arg0, %c0_i32 : i32, i32
  }
}

</mosaic_0001>

<llo_original>
// kernel: tpu_custom_call.1
$region0: #{tpu_custom_call.1}
  #allocation0 [shape = 'u32[]', space=smem, size = 0x4, offset = 0x4, fixed_abs, tag = 'smem constant byte address 0x4 - core index']
  #allocation1 [shape = 'u32[144,128]{1,0:T(1,128)}', space=vmem, size = 0x12000, scoped, tag = 'internal scratch']
  %s0 = inlined_call_operand.hbm [shape: f32[16,256], index: 0, kind: input, shape index: {}]
  %s1 = inlined_call_operand.hbm [shape: f32[16,256], index: 1, kind: input, shape index: {}]
  %s2 = inlined_call_operand.vmem [shape: f32[16,1], index: 2, kind: output, shape index: {}]
  %s3 = sld [smem:[#allocation0]]
  $region49: #{tpu_custom_call.1} parent=0
    _
  %s5 = ssub.s32 1, %s3
  %s6 = scalar_select 0, %s5, %s3
  $region1: #{tpu_custom_call.1} parent=0
    #allocation2 [shape = 'u8[16384]{0}', space=vmem, size = 0x4000, scoped, tag = 'input window, operand 0']
    #allocation3 [shape = 's32[2]{0}', space=sflag, size = 0x8, scoped, tag = 'scoped memory for tpu_custom_call.1']
    #allocation4 [shape = 'u8[16384]{0}', space=vmem, size = 0x4000, scoped, tag = 'input window, operand 1']
    #allocation5 [shape = 's32[2]{0}', space=sflag, size = 0x8, scoped, tag = 'scoped memory for tpu_custom_call.1']
    %7 = vsyncpa [#allocation3], 0
    %s8 = scalar_lea.sflag [#allocation3], 1
    %9 = vsyncpa %s8, 0
    %10 = vsyncpa [#allocation5], 0
    %s11 = scalar_lea.sflag [#allocation5], 1
    %12 = vsyncpa %s11, 0
    loop: start=0, step=1, limit=4
    $region2: #{tpu_custom_call.1} parent=1 // loop_pre_header
      _
    $region3: #{tpu_custom_call.1} parent=1 // loop_header
      %s14 = sphi 0, %s18
      %p15 = scmp.ge.s32.totalorder %s14, 4
      %s24 = sphi 0, %s26
      %s27 = sphi 0, %s24
      %s28 = sphi 0, %s27
      %s44 = sphi 0, %s28
      %s50 = sphi 0, %s52
      %s53 = sphi 0, %s50
      %s54 = sphi 0, %s53
      %s70 = sphi 0, %s54
      %s76 = sphi 0, %s78
      %s79 = sphi 0, %s76
      %s80 = sphi 0, %s79
      %s96 = sphi 0, %s80
    $region4: #{tpu_custom_call.1} parent=1 // loop_header_branch
      %17 = sbr.rel (%p15) target = $region8
    $region5: #{tpu_custom_call.1} parent=1 // loop_body
      %s19 = ssub.s32 %s14, 1
      %s20 = ssub.s32 %s14, 2
      %s21 = sadd.s32 %s14, 1
      %s22 = ssub.s32 %s14, %s21
      %p23 = scmp.eq.s32.totalorder %s22, 0
      %s25 = sadd.s32 %s24, 1
      %s26 = scalar_select %p23, %s24, %s25
      %p29 = pneg %p23
      %p30 = scmp.eq.s32.totalorder %s14, 1
      %p31 = por %p29, %p30
      %p32 = scmp.ne.s32.totalorder %s24, %s27
      %p33 = scmp.eq.s32.totalorder %s14, 0
      %p34 = por %p32, %p33
      %p35 = scmp.ne.s32.totalorder %s24, %s27
      %p36 = scmp.eq.s32.totalorder %s19, 1
      %p37 = por %p35, %p36
      %p38 = scmp.ne.s32.totalorder %s27, %s28
      %p39 = scmp.eq.s32.totalorder %s19, 0
      %p40 = por %p38, %p39
      %p41 = scmp.ne.s32.totalorder %s27, %s28
      %p42 = scmp.eq.s32.totalorder %s20, 1
      %p43 = por %p41, %p42
      %p45 = scmp.ne.s32.totalorder %s28, %s44
      %p46 = scmp.eq.s32.totalorder %s20, 0
      %p47 = por %p45, %p46
      %s48 = ssub.s32 %s14, %s21
      %p49 = scmp.eq.s32.totalorder %s48, 0
      %s51 = sadd.s32 %s50, 1
      %s52 = scalar_select %p49, %s50, %s51
      %p55 = pneg %p49
      %p56 = scmp.eq.s32.totalorder %s14, 1
      %p57 = por %p55, %p56
      %p58 = scmp.ne.s32.totalorder %s50, %s53
      %p59 = scmp.eq.s32.totalorder %s14, 0
      %p60 = por %p58, %p59
      %p61 = scmp.ne.s32.totalorder %s50, %s53
      %p62 = scmp.eq.s32.totalorder %s19, 1
      %p63 = por %p61, %p62
      %p64 = scmp.ne.s32.totalorder %s53, %s54
      %p65 = scmp.eq.s32.totalorder %s19, 0
      %p66 = por %p64, %p65
      %p67 = scmp.ne.s32.totalorder %s53, %s54
      %p68 = scmp.eq.s32.totalorder %s20, 1
      %p69 = por %p67, %p68
      %p71 = scmp.ne.s32.totalorder %s54, %s70
      %p72 = scmp.eq.s32.totalorder %s20, 0
      %p73 = por %p71, %p72
      %s74 = ssub.s32 %s14, %s21
      %p75 = scmp.eq.s32.totalorder %s74, 0
      %s77 = sadd.s32 %s76, 1
      %s78 = scalar_select %p75, %s76, %s77
      %p81 = pneg %p75
      %p82 = scmp.eq.s32.totalorder %s14, 1
      %p83 = por %p81, %p82
      %p84 = scmp.ne.s32.totalorder %s76, %s79
      %p85 = scmp.eq.s32.totalorder %s14, 0
      %p86 = por %p84, %p85
      %p87 = scmp.ne.s32.totalorder %s76, %s79
      %p88 = scmp.eq.s32.totalorder %s19, 1
      %p89 = por %p87, %p88
      %p90 = scmp.ne.s32.totalorder %s79, %s80
      %p91 = scmp.eq.s32.totalorder %s19, 0
      %p92 = por %p90, %p91
      %p93 = scmp.ne.s32.totalorder %s79, %s80
      %p94 = scmp.eq.s32.totalorder %s20, 1
      %p95 = por %p93, %p94
      %p97 = scmp.ne.s32.totalorder %s80, %s96
      %p98 = scmp.eq.s32.totalorder %s20, 0
      %p99 = por %p97, %p98
      %p100 = scmp.le.s32.totalorder 1, %s14
      %p101 = scmp.lt.s32.totalorder %s14, 3
      %p102 = pnand %p100, %p101
      %p103 = pneg %p102
      // Predicated region
      $region9: #{tpu_custom_call.1} parent=5 // pred_check
        _
      $region10: #{tpu_custom_call.1} parent=5 // pred_check_branch
        %105 = sbr.rel (%p102) target = $region12
      $region11: #{tpu_custom_call.1} parent=5 // pred_region
        %s106 = ssub.s32 %s14, 1
      $region12: #{tpu_custom_call.1} parent=5 // pred_fallthru
        _
      %p107 = scmp.lt.s32.totalorder %s14, 2
      // Predicated region
      $region13: #{tpu_custom_call.1} parent=5 // pred_check
        %p108 = pneg %p107
      $region14: #{tpu_custom_call.1} parent=5 // pred_check_branch
        %110 = sbr.rel (%p108) target = $region16
      $region15: #{tpu_custom_call.1} parent=5 // pred_region
        // Predicated region
        $region17: #{tpu_custom_call.1} parent=15 // pred_check
          %p111 = pneg %p34
        $region18: #{tpu_custom_call.1} parent=15 // pred_check_branch
          %113 = sbr.rel (%p111) target = $region20
        $region19: #{tpu_custom_call.1} parent=15 // pred_region
          %s114 = sand.u32 %s24, 1
          %s115 = scalar_lea.sflag [#allocation3], %s114
          %s116 = sand.u32 %s24, 1
          %s117 = smul.addr %s116, 16
          %s118 = scalar_lea.vmem [#allocation2], %s117
          %s120 = ssub.s32 256, 256
          %121 = vsyncadd %s115, %s120
          %s122 = smul.addr %s14, 2
          %s123 = smul.addr %s122, 128
          %s124 = scalar_lea.hbm %s0, %s123
          %s126 = sshll.u32 %s118, 4
          %s127 = int_to_ptr.vmem [resolvable:$true] %s126
          %129 = dma.hbm_to_vmem [thread:$0]  %s124, 256, %s127, %s115
        $region20: #{tpu_custom_call.1} parent=15 // pred_fallthru
          _
        // Predicated region
        $region21: #{tpu_custom_call.1} parent=15 // pred_check
          %p130 = pneg %p60
        $region22: #{tpu_custom_call.1} parent=15 // pred_check_branch
          %132 = sbr.rel (%p130) target = $region24
        $region23: #{tpu_custom_call.1} parent=15 // pred_region
          %s133 = sand.u32 %s50, 1
          %s134 = scalar_lea.sflag [#allocation5], %s133
          %s135 = sand.u32 %s50, 1
          %s136 = smul.addr %s135, 16
          %s137 = scalar_lea.vmem [#allocation4], %s136
          %s139 = ssub.s32 256, 256
          %140 = vsyncadd %s134, %s139
          %s141 = smul.addr %s14, 2
          %s142 = smul.addr %s141, 128
          %s143 = scalar_lea.hbm %s1, %s142
          %s145 = sshll.u32 %s137, 4
          %s146 = int_to_ptr.vmem [resolvable:$true] %s145
          %148 = dma.hbm_to_vmem [thread:$0]  %s143, 256, %s146, %s134
        $region24: #{tpu_custom_call.1} parent=15 // pred_fallthru
          _
      $region16: #{tpu_custom_call.1} parent=5 // pred_fallthru
        _
      %p149 = scmp.le.s32.totalorder 1, %s14
      %p150 = scmp.lt.s32.totalorder %s14, 3
      %p151 = pnand %p149, %p150
      %p152 = pneg %p151
      // Predicated region
      $region25: #{tpu_custom_call.1} parent=5 // pred_check
        _
      $region26: #{tpu_custom_call.1} parent=5 // pred_check_branch
        %154 = sbr.rel (%p151) target = $region28
      $region27: #{tpu_custom_call.1} parent=5 // pred_region
        %s155 = ssub.s32 %s14, 1
        %s156 = sand.u32 %s27, 1
        %s157 = scalar_lea.sflag [#allocation3], %s156
        %s158 = sand.u32 %s27, 1
        %s159 = smul.addr %s158, 16
        %s160 = scalar_lea.vmem [#allocation2], %s159
        // Predicated region
        $region29: #{tpu_custom_call.1} parent=27 // pred_check
          %p161 = pneg %p40
        $region30: #{tpu_custom_call.1} parent=27 // pred_check_branch
          %163 = sbr.rel (%p161) target = $region32
        $region31: #{tpu_custom_call.1} parent=27 // pred_region
          %164 = dma.done %s157, 256
        $region32: #{tpu_custom_call.1} parent=27 // pred_fallthru
          _
        %s165 = sand.u32 %s53, 1
        %s166 = scalar_lea.sflag [#allocation5], %s165
        %s167 = sand.u32 %s53, 1
        %s168 = smul.addr %s167, 16
        %s169 = scalar_lea.vmem [#allocation4], %s168
        // Predicated region
        $region33: #{tpu_custom_call.1} parent=27 // pred_check
          %p170 = pneg %p66
        $region34: #{tpu_custom_call.1} parent=27 // pred_check_branch
          %172 = sbr.rel (%p170) target = $region36
        $region35: #{tpu_custom_call.1} parent=27 // pred_region
          %173 = dma.done %s166, 256
        $region36: #{tpu_custom_call.1} parent=27 // pred_fallthru
          _
        %s174 = sand.u32 %s27, 1
        %s175 = scalar_lea.sflag [#allocation3], %s174
        %s176 = sand.u32 %s27, 1
        %s177 = smul.addr %s176, 16
        %s178 = scalar_lea.vmem [#allocation2], %s177
        %p179 = pneg %p40
        %p180 = pneg %p37
        %s181 = sand.u32 %s53, 1
        %s182 = scalar_lea.sflag [#allocation5], %s181
        %s183 = sand.u32 %s53, 1
        %s184 = smul.addr %s183, 16
        %s185 = scalar_lea.vmem [#allocation4], %s184
        %p186 = pneg %p66
        %p187 = pneg %p63
        %p188 = pneg %p92
        %p189 = pneg %p89
        %p190 = scmp.lt.s32.totalorder %s19, 1
        %s191 = scalar_select %p190, %s19, 1
        %s192 = smul.addr %s191, 8
        %s193 = scalar_lea.vmem %s2, %s192
        %p194 = scmp.lt.s32.totalorder %s19, 1
        %s195 = scalar_select %p194, %s19, 1
        %s196 = smul.addr %s195, 8
        %s197 = scalar_lea.vmem %s2, %s196
        %v198 = vld [vmem:[%s160] sm:$0xff]
        %v199 = vld [vmem:[%s160 + $0x8] sm:$0xff]
        %v200 = vld [vmem:[%s169] sm:$0xff]
        %v201 = vld [vmem:[%s169 + $0x8] sm:$0xff]
        %v202 = vmax.f32 %v198, %v199
        %203 = vmax.xlane.f32.xlu0 %v202
        %v204 = vpop.xlane.xlu0 %203
        %v205 = vsub.f32 %v198, %v204
        %v206 = vsub.f32 %v199, %v204
        %v207 = vmul.f32 %v205, 0.25
        %v208 = vmul.f32 %v206, 0.25
        %v209 = vmul.f32 %v207, 1.442695
        %v210 = vpow.pop %v209
        %v211 = vmul.f32 %v208, 1.442695
        %v212 = vpow.pop %v211
        %v213 = vmul.f32 %v210, %v210
        %v214 = vmul.f32 %v212, %v212
        %v215 = vmul.f32 %v213, %v213
        %v216 = vmul.f32 %v214, %v214
        %v217 = vadd.f32 %v215, %v216
        %218 = vadd.xlane.f32.xlu0 %v217
        %v219 = vpop.xlane.xlu0 %218
        %v220 = vlog2.pop %v219
        %v221 = vmul.f32 %v220, 0.6931472
        %v222 = vadd.f32 %v204, %v221
        %v223 = vsub.f32 %v198, %v222
        %v224 = vsub.f32 %v199, %v222
        %v225 = vadd.f32 %v210, %v212
        %226 = vadd.xlane.f32.xlu0 %v225
        %v227 = vpop.xlane.xlu0 %226
        %v228 = vlog2.pop %v227
        %v229 = vmul.f32 %v228, 0.6931472
        %v230 = vmul.f32 %v221, 0.25
        %v231 = vsub.f32 %v229, %v230
        %v232 = vrsqrt.pop %v200
        %v233 = vmul.f32 %v200, %v232
        %vm234 = vcmp.eq.f32.partialorder %v200, inf
        %v235 = vsel %vm234, %v200, %v233
        %vm236 = vcmp.eq.f32.partialorder %v200, 0.0
        %v237 = vand.u32 %v200, 2147483648
        %v238 = vsel %vm236, %v237, %v235
        %v239 = vrsqrt.pop %v201
        %v240 = vmul.f32 %v201, %v239
        %vm241 = vcmp.eq.f32.partialorder %v201, inf
        %v242 = vsel %vm241, %v201, %v240
        %vm243 = vcmp.eq.f32.partialorder %v201, 0.0
        %v244 = vand.u32 %v201, 2147483648
        %v245 = vsel %vm243, %v244, %v242
        %v246 = vrsqrt.pop %v238
        %v247 = vmul.f32 %v238, %v246
        %vm248 = vcmp.eq.f32.partialorder %v238, inf
        %v249 = vsel %vm248, %v238, %v247
        %vm250 = vcmp.eq.f32.partialorder %v238, 0.0
        %v251 = vand.u32 %v238, 2147483648
        %v252 = vsel %vm250, %v251, %v249
        %v253 = vrsqrt.pop %v245
        %v254 = vmul.f32 %v245, %v253
        %vm255 = vcmp.eq.f32.partialorder %v245, inf
        %v256 = vsel %vm255, %v245, %v254
        %vm257 = vcmp.eq.f32.partialorder %v245, 0.0
        %v258 = vand.u32 %v245, 2147483648
        %v259 = vsel %vm257, %v258, %v256
        %v260 = vadd.f32 %v252, %v259
        %261 = vadd.xlane.f32.xlu0 %v260
        %v262 = vpop.xlane.xlu0 %261
        %v263 = vmul.f32 %v252, %v223
        %v264 = vmul.f32 %v259, %v224
        %v265 = vadd.f32 %v263, %v264
        %266 = vadd.xlane.f32.xlu0 %v265
        %v267 = vpop.xlane.xlu0 %266
        %v268 = vrcp.pop %v262
        %v269 = vmul.f32 %v267, %v268
        %v270 = vmul.f32 %v269, 0.25
        %v271 = vsub.f32 %v231, %v270
        %vm272 = vcmask 7168
        %273 = vst.msk [vmem:[%s197] sm:$0xff] %vm272, %v271
        %p274 = scmp.lt.s32.totalorder %s19, 1
        %s275 = scalar_select %p274, %s19, 1
        %s276 = smul.addr %s275, 8
        %s277 = scalar_lea.vmem %s2, %s276
        // Predicated region
        $region37: #{tpu_custom_call.1} parent=27 // pred_check
          %p278 = pneg %p89
        $region38: #{tpu_custom_call.1} parent=27 // pred_check_branch
          %280 = sbr.rel (%p278) target = $region40
        $region39: #{tpu_custom_call.1} parent=27 // pred_region
          _
        $region40: #{tpu_custom_call.1} parent=27 // pred_fallthru
          _
      $region28: #{tpu_custom_call.1} parent=5 // pred_fallthru
        _
      %p281 = scmp.le.s32.totalorder 2, %s14
      // Predicated region
      $region41: #{tpu_custom_call.1} parent=5 // pred_check
        %p282 = pneg %p281
      $region42: #{tpu_custom_call.1} parent=5 // pred_check_branch
        %284 = sbr.rel (%p282) target = $region44
      $region43: #{tpu_custom_call.1} parent=5 // pred_region
        %s285 = ssub.s32 %s14, 2
        // Predicated region
        $region45: #{tpu_custom_call.1} parent=43 // pred_check
          %p286 = pneg %p95
        $region46: #{tpu_custom_call.1} parent=43 // pred_check_branch
          %288 = sbr.rel (%p286) target = $region48
        $region47: #{tpu_custom_call.1} parent=43 // pred_region
          %p289 = scmp.lt.s32.totalorder %s20, 1
          %s290 = scalar_select %p289, %s20, 1
          %s291 = smul.addr %s290, 8
          %s292 = scalar_lea.vmem %s2, %s291
        $region48: #{tpu_custom_call.1} parent=43 // pred_fallthru
          _
      $region44: #{tpu_custom_call.1} parent=5 // pred_fallthru
        _
    $region6: #{tpu_custom_call.1} parent=1 // loop_footer
      %s18 = sadd.s32 1, %s14
    $region7: #{tpu_custom_call.1} parent=1 // loop_footer_branch
      %13 = sbr.rel target = $region3
    $region8: #{tpu_custom_call.1} parent=1 // loop_exit
      _
    %293 = vsyncpa [#allocation3], 1
    %s294 = scalar_lea.sflag [#allocation3], 1
    %295 = vsyncpa %s294, 1
    %296 = vsyncpa [#allocation5], 1
    %s297 = scalar_lea.sflag [#allocation5], 1
    %298 = vsyncpa %s297, 1

</llo_original>
